<compile_context>
chip_gen: v5e
topology: v5e:2x2
jax: 0.10.0
libtpu: 0.0.40
codegen_flags: <defaults>
</compile_context>

<pallas_src>
import functools

import jax
import jax.numpy as jnp
import numpy as np
from jax.experimental import pallas as pl
from jax.experimental.pallas import tpu as pltpu


def _gather_kernel(n_tokens, rows_ref, clients_ref, wte_hbm, prefix_hbm, o_ref,
                   sems):
    # grid = (B,): one grid step builds the full [S, D] sequence for batch b.
    #   rows_ref    : (B * (S - n_tokens),) int32 in SMEM — clamped token ids.
    #   clients_ref : (B,) int32 in SMEM — clamped 0-based client ids.
    #   wte_hbm     : (V, D) embedding table, left in HBM (pl.ANY).
    #   prefix_hbm  : (C, n_tokens, D) sampled prefixes, left in HBM (pl.ANY).
    #   o_ref       : (S, D) output block in VMEM (batch dim squeezed).
    #   sems        : (S - n_tokens + 1,) DMA semaphores (one per in-flight copy).
    b = pl.program_id(0)
    n_real = o_ref.shape[0] - n_tokens

    # Client prefix: single (n_tokens, D) DMA straight into the output tile.
    prefix_copy = pltpu.make_async_copy(
        prefix_hbm.at[clients_ref[b]],
        o_ref.at[pl.ds(0, n_tokens), :],
        sems.at[n_real])
    prefix_copy.start()

    def row_copy(s):
        row = rows_ref[b * n_real + s]
        return pltpu.make_async_copy(
            wte_hbm.at[pl.ds(row, 1), :],
            o_ref.at[pl.ds(n_tokens + s, 1), :],
            sems.at[s])

    # Issue every row-gather DMA up front so they all overlap each other, the
    # prefix DMA, and the previous step's output writeback.
    @pl.loop(0, n_real)
    def _issue(s):
        row_copy(s).start()

    # Drain: all data lands directly in o_ref; no vector copies needed.
    @pl.loop(0, n_real)
    def _wait(s):
        row_copy(s).wait()

    prefix_copy.wait()


def soft_client_embedding_forward(tokens, wte_weight, sample_prefix, n_tokens):
    """tokens: [B, S] int32, wte_weight: [V, D], sample_prefix: [C, n_tokens, D]."""
    B, S = tokens.shape
    V, D = wte_weight.shape
    C, NT, D2 = sample_prefix.shape
    assert NT == n_tokens and D2 == D and S > n_tokens
    n_real = S - n_tokens

    tokens = tokens.astype(jnp.int32)
    # 1-D scalar-prefetch tables (1-D avoids the [ceil/8*8, ceil/128*128] SMEM
    # padding rule for 2-D arrays).  Clamped so invalid ids cannot turn into an
    # arbitrary HBM read (PyTorch would index-error; valid inputs unaffected).
    rows = jnp.clip(tokens[:, n_tokens:], 0, V - 1).reshape(-1)   # (B * n_real,)
    clients = jnp.clip(tokens[:, 0] - 1, 0, C - 1)                # (B,)

    grid_spec = pltpu.PrefetchScalarGridSpec(
        num_scalar_prefetch=2,
        grid=(B,),
        in_specs=[
            pl.BlockSpec(memory_space=pl.ANY),   # wte table stays in HBM
            pl.BlockSpec(memory_space=pl.ANY),   # sampled prefixes stay in HBM
        ],
        out_specs=pl.BlockSpec((None, S, D),
                               lambda b, rows, clients: (b, 0, 0)),
        scratch_shapes=[
            pltpu.SemaphoreType.DMA((n_real + 1,)),
        ],
    )

    itemsize = jnp.dtype(wte_weight.dtype).itemsize
    cost = pl.CostEstimate(
        flops=0,
        transcendentals=0,
        bytes_accessed=2 * B * S * D * itemsize,   # read gathered rows + write out
    )

    out = pl.pallas_call(
        functools.partial(_gather_kernel, n_tokens),
        grid_spec=grid_spec,
        out_shape=jax.ShapeDtypeStruct((B, S, D), wte_weight.dtype),
        compiler_params=pltpu.CompilerParams(
            dimension_semantics=("parallel",)),   # shard B across TCs on v7x
        cost_estimate=cost,
    )(rows, clients, wte_weight, sample_prefix)
    return out


if __name__ == "__main__":
    key = jax.random.PRNGKey(0)
    num_clients, n_tokens = 3, 4
    V, D = 64, 128         # vocab size, embedding dim (wte.weight.size(1)); lane-dense D
    B, S = 2, 12           # batch, total sequence length (n_tokens prefix + 8 real)

    k1, k2, k3, k4, k5, k6 = jax.random.split(key, 6)

    # Deterministic "parameters" (shapes match the module __init__; fallback uniform init).
    wte_weight = (jax.random.normal(k1, (V, D), jnp.float32) * 0.02).astype(jnp.float32)
    alphas = jax.random.uniform(k2, (num_clients, n_tokens, D), jnp.float32, 1.0, 2.5)
    betas = jax.random.uniform(k3, (num_clients, n_tokens, D), jnp.float32, 4.0, 5.5)

    # Beta(alphas, betas).sample() done once (sample_flag=True path) in plain JAX glue.
    # TODO(synk): the pickle-based init_path loading has no in-script equivalent.
    sample_prefix = jax.random.beta(k4, alphas, betas).astype(jnp.float32)

    # tokens: column 0 = client index (1-based), columns [1, n_tokens) placeholders,
    # columns [n_tokens, S) real vocab ids.
    client_idx = jax.random.randint(k5, (B,), 1, num_clients + 1, dtype=jnp.int32)
    real_tokens = jax.random.randint(k6, (B, S - n_tokens), 0, V, dtype=jnp.int32)
    tokens = jnp.concatenate(
        [client_idx[:, None], jnp.zeros((B, n_tokens - 1), jnp.int32), real_tokens], axis=1
    ).astype(jnp.int32)

    out = soft_client_embedding_forward(tokens, wte_weight, sample_prefix, n_tokens)
    out = jax.block_until_ready(out)

    # Plain-JAX reference of the PyTorch forward.
    ref_prefix = sample_prefix[tokens[:, 0] - 1]            # [B, n_tokens, D]
    ref_emb = wte_weight[tokens[:, n_tokens:]]              # [B, S-n_tokens, D]
    ref = jnp.concatenate([ref_prefix, ref_emb], axis=1)    # [B, S, D]

    assert out.shape == (B, S, D) and out.dtype == jnp.float32
    np.testing.assert_allclose(np.asarray(out), np.asarray(ref), rtol=1e-6, atol=1e-6)
    print("KERNEL_OK")
</pallas_src>

<mosaic_0001>
module attributes {stable_mosaic.version = 11 : i64} {
  func.func @_gather_kernel(%arg0: i32, %arg1: memref<16xi32, #tpu.memory_space<smem>>, %arg2: memref<2xi32, #tpu.memory_space<smem>>, %arg3: memref<64x128xf32, #tpu.memory_space<any>>, %arg4: memref<3x4x128xf32, #tpu.memory_space<any>>, %arg5: memref<1x12x128xf32, #tpu.memory_space<vmem>>, %arg6: memref<9x!tpu.dma_semaphore, #tpu.memory_space<semaphore_mem>>) attributes {dimension_semantics = [#tpu.dimension_semantics<parallel>], iteration_bounds = array<i64: 2>, scalar_prefetch = 2 : i64, scratch_operands = 1 : i64, tpu.core_type = #tpu.core_type<tc>, window_params = [{}, {}, {transform_indices = @transform_2, window_bounds = array<i64: 1, 12, 128>}]} {
    %0 = arith.index_cast %arg0 : i32 to index
    %1 = memref.load %arg2[%0] : memref<2xi32, #tpu.memory_space<smem>>
    %c8_i32 = arith.constant 8 : i32
    %c0_i32 = arith.constant 0 : i32
    %c0_i32_0 = arith.constant 0 : i32
    %2 = tpu.memref_slice %arg4[%1, %c0_i32, %c0_i32_0] : memref<3x4x128xf32, #tpu.memory_space<any>> -> memref<1x4x128xf32, #tpu.memory_space<any>>
    %3 = tpu.memref_squeeze %2 : memref<1x4x128xf32, #tpu.memory_space<any>> -> memref<4x128xf32, #tpu.memory_space<any>>
    %c0_i32_1 = arith.constant 0 : i32
    %c0_i32_2 = arith.constant 0 : i32
    %c0_i32_3 = arith.constant 0 : i32
    %4 = tpu.memref_slice %arg5[%c0_i32_1, %c0_i32_2, %c0_i32_3] : memref<1x12x128xf32, #tpu.memory_space<vmem>> -> memref<1x4x128xf32, #tpu.memory_space<vmem>>
    %5 = tpu.memref_squeeze %4 : memref<1x4x128xf32, #tpu.memory_space<vmem>> -> memref<4x128xf32, #tpu.memory_space<vmem>>
    %6 = tpu.memref_slice %arg6[%c8_i32] : memref<9x!tpu.dma_semaphore, #tpu.memory_space<semaphore_mem>> -> memref<1x!tpu.dma_semaphore, #tpu.memory_space<semaphore_mem>>
    %7 = tpu.memref_squeeze %6 : memref<1x!tpu.dma_semaphore, #tpu.memory_space<semaphore_mem>> -> memref<!tpu.dma_semaphore, #tpu.memory_space<semaphore_mem>>
    tpu.enqueue_dma source(%3 : memref<4x128xf32, #tpu.memory_space<any>>) target(%5 : memref<4x128xf32, #tpu.memory_space<vmem>>) target_semaphore(%7 : memref<!tpu.dma_semaphore, #tpu.memory_space<semaphore_mem>>)
    %c0_i32_4 = arith.constant 0 : i32
    %c8_i32_5 = arith.constant 8 : i32
    %8 = arith.addi %c0_i32_4, %c8_i32_5 : i32
    %c1_i32 = arith.constant 1 : i32
    scf.for %arg7 = %c0_i32_4 to %8 step %c1_i32  : i32 {
      %c1_i32_17 = arith.constant 1 : i32
      %16 = arith.muli %arg7, %c1_i32_17 : i32
      %c0_i32_18 = arith.constant 0 : i32
      %17 = arith.addi %c0_i32_18, %16 : i32
      %c8_i32_19 = arith.constant 8 : i32
      %18 = arith.muli %arg0, %c8_i32_19 : i32
      %19 = arith.addi %18, %17 : i32
      %20 = arith.index_cast %19 : i32 to index
      %21 = memref.load %arg1[%20] : memref<16xi32, #tpu.memory_space<smem>>
      %c4_i32 = arith.constant 4 : i32
      %22 = arith.addi %c4_i32, %17 : i32
      %c0_i32_20 = arith.constant 0 : i32
      %23 = tpu.memref_slice %arg3[%21, %c0_i32_20] : memref<64x128xf32, #tpu.memory_space<any>> -> memref<1x128xf32, #tpu.memory_space<any>>
      %c0_i32_21 = arith.constant 0 : i32
      %c0_i32_22 = arith.constant 0 : i32
      %24 = tpu.memref_slice %arg5[%c0_i32_21, %22, %c0_i32_22] : memref<1x12x128xf32, #tpu.memory_space<vmem>> -> memref<1x1x128xf32, #tpu.memory_space<vmem>>
      %25 = tpu.memref_squeeze %24 : memref<1x1x128xf32, #tpu.memory_space<vmem>> -> memref<1x128xf32, #tpu.memory_space<vmem>>
      %26 = tpu.memref_slice %arg6[%17] : memref<9x!tpu.dma_semaphore, #tpu.memory_space<semaphore_mem>> -> memref<1x!tpu.dma_semaphore, #tpu.memory_space<semaphore_mem>>
      %27 = tpu.memref_squeeze %26 : memref<1x!tpu.dma_semaphore, #tpu.memory_space<semaphore_mem>> -> memref<!tpu.dma_semaphore, #tpu.memory_space<semaphore_mem>>
      tpu.enqueue_dma source(%23 : memref<1x128xf32, #tpu.memory_space<any>>) target(%25 : memref<1x128xf32, #tpu.memory_space<vmem>>) target_semaphore(%27 : memref<!tpu.dma_semaphore, #tpu.memory_space<semaphore_mem>>)
    }
    %c8_i32_6 = arith.constant 8 : i32
    %c0_i32_7 = arith.constant 0 : i32
    %c8_i32_8 = arith.constant 8 : i32
    %9 = arith.addi %c0_i32_7, %c8_i32_8 : i32
    %c1_i32_9 = arith.constant 1 : i32
    scf.for %arg7 = %c0_i32_7 to %9 step %c1_i32_9  : i32 {
      %c1_i32_17 = arith.constant 1 : i32
      %16 = arith.muli %arg7, %c1_i32_17 : i32
      %c0_i32_18 = arith.constant 0 : i32
      %17 = arith.addi %c0_i32_18, %16 : i32
      %c8_i32_19 = arith.constant 8 : i32
      %18 = arith.muli %arg0, %c8_i32_19 : i32
      %19 = arith.addi %18, %17 : i32
      %20 = arith.index_cast %19 : i32 to index
      %21 = memref.load %arg1[%20] : memref<16xi32, #tpu.memory_space<smem>>
      %c4_i32 = arith.constant 4 : i32
      %22 = arith.addi %c4_i32, %17 : i32
      %c0_i32_20 = arith.constant 0 : i32
      %23 = tpu.memref_slice %arg3[%21, %c0_i32_20] : memref<64x128xf32, #tpu.memory_space<any>> -> memref<1x128xf32, #tpu.memory_space<any>>
      %c0_i32_21 = arith.constant 0 : i32
      %c0_i32_22 = arith.constant 0 : i32
      %24 = tpu.memref_slice %arg5[%c0_i32_21, %22, %c0_i32_22] : memref<1x12x128xf32, #tpu.memory_space<vmem>> -> memref<1x1x128xf32, #tpu.memory_space<vmem>>
      %25 = tpu.memref_squeeze %24 : memref<1x1x128xf32, #tpu.memory_space<vmem>> -> memref<1x128xf32, #tpu.memory_space<vmem>>
      %26 = tpu.memref_slice %arg6[%17] : memref<9x!tpu.dma_semaphore, #tpu.memory_space<semaphore_mem>> -> memref<1x!tpu.dma_semaphore, #tpu.memory_space<semaphore_mem>>
      %27 = tpu.memref_squeeze %26 : memref<1x!tpu.dma_semaphore, #tpu.memory_space<semaphore_mem>> -> memref<!tpu.dma_semaphore, #tpu.memory_space<semaphore_mem>>
      tpu.wait_dma2 semaphore(%27 : memref<!tpu.dma_semaphore, #tpu.memory_space<semaphore_mem>>) src(%23 : memref<1x128xf32, #tpu.memory_space<any>>) dst(%25 : memref<1x128xf32, #tpu.memory_space<vmem>>)
    }
    %c8_i32_10 = arith.constant 8 : i32
    %c8_i32_11 = arith.constant 8 : i32
    %c0_i32_12 = arith.constant 0 : i32
    %c0_i32_13 = arith.constant 0 : i32
    %10 = tpu.memref_slice %arg4[%1, %c0_i32_12, %c0_i32_13] : memref<3x4x128xf32, #tpu.memory_space<any>> -> memref<1x4x128xf32, #tpu.memory_space<any>>
    %11 = tpu.memref_squeeze %10 : memref<1x4x128xf32, #tpu.memory_space<any>> -> memref<4x128xf32, #tpu.memory_space<any>>
    %c0_i32_14 = arith.constant 0 : i32
    %c0_i32_15 = arith.constant 0 : i32
    %c0_i32_16 = arith.constant 0 : i32
    %12 = tpu.memref_slice %arg5[%c0_i32_14, %c0_i32_15, %c0_i32_16] : memref<1x12x128xf32, #tpu.memory_space<vmem>> -> memref<1x4x128xf32, #tpu.memory_space<vmem>>
    %13 = tpu.memref_squeeze %12 : memref<1x4x128xf32, #tpu.memory_space<vmem>> -> memref<4x128xf32, #tpu.memory_space<vmem>>
    %14 = tpu.memref_slice %arg6[%c8_i32_11] : memref<9x!tpu.dma_semaphore, #tpu.memory_space<semaphore_mem>> -> memref<1x!tpu.dma_semaphore, #tpu.memory_space<semaphore_mem>>
    %15 = tpu.memref_squeeze %14 : memref<1x!tpu.dma_semaphore, #tpu.memory_space<semaphore_mem>> -> memref<!tpu.dma_semaphore, #tpu.memory_space<semaphore_mem>>
    tpu.wait_dma2 semaphore(%15 : memref<!tpu.dma_semaphore, #tpu.memory_space<semaphore_mem>>) src(%11 : memref<4x128xf32, #tpu.memory_space<any>>) dst(%13 : memref<4x128xf32, #tpu.memory_space<vmem>>)
    return
  }
  func.func @transform_2(%arg0: i32, %arg1: memref<16xi32, #tpu.memory_space<smem>>, %arg2: memref<2xi32, #tpu.memory_space<smem>>) -> (i32, i32, i32) {
    %c0_i32 = arith.constant 0 : i32
    %c0_i32_0 = arith.constant 0 : i32
    %c0_i32_1 = arith.constant 0 : i32
    return %arg0, %c0_i32, %c0_i32_0 : i32, i32, i32
  }
}

</mosaic_0001>

<llo_original>
// kernel: tpu_custom_call.1
$region0: #{tpu_custom_call.1}
  #allocation0 [shape = 'u32[]', space=smem, size = 0x4, offset = 0x4, fixed_abs, tag = 'smem constant byte address 0x4 - core index']
  #allocation1 [shape = 'u32[72,128]{1,0:T(1,128)}', space=vmem, size = 0x9000, scoped, tag = 'internal scratch']
  #allocation2 [shape = 's32[9]{0}', space=sflag, size = 0x24, scoped, tag = 'scratch operand']
  #allocation3 [shape = 's32[1]{0}', space=sflag, size = 0x4, scoped, tag = 'scoped memory for tpu_custom_call.1']
  #allocation4 [shape = 'u8[512]{0}', space=smem, size = 0x200, scoped, tag = 'prefetched SMEM operand 0']
  #allocation5 [shape = 'u8[512]{0}', space=smem, size = 0x200, scoped, tag = 'prefetched SMEM operand 1']
  #allocation6 [shape = 's32[]', space=sflag, size = 0x4, offset = 0, fixed_abs, tag = 'sflag constant byte address 0x0 - dummy sync flag']
  #allocation7 [shape = 's32[]', space=sflag, size = 0x4, offset = 0, fixed_abs, tag = 'sflag constant byte address 0x0 - dummy sync flag']
  #allocation8 [shape = 'u32[]', space=smem, size = 0x4, offset = 0x44, fixed_abs, tag = 'smem constant byte address 0x44 - assertion arg 0']
  #allocation9 [shape = 'u32[]', space=smem, size = 0x4, offset = 0x48, fixed_abs, tag = 'smem constant byte address 0x48 - assertion arg 1']
  #allocation10 [shape = 's32[]', space=sflag, size = 0x4, offset = 0, fixed_abs, tag = 'sflag constant byte address 0x0 - dummy sync flag']
  #allocation11 [shape = 's32[]', space=sflag, size = 0x4, offset = 0, fixed_abs, tag = 'sflag constant byte address 0x0 - dummy sync flag']
  %s0 = inlined_call_operand.hbm [shape: s32[16], index: 0, kind: input, shape index: {}]
  %s1 = inlined_call_operand.hbm [shape: s32[2], index: 1, kind: input, shape index: {}]
  %s2 = inlined_call_operand.hbm [shape: f32[64,128], index: 2, kind: input, shape index: {}]
  %s3 = inlined_call_operand.hbm [shape: f32[3,4,128], index: 3, kind: input, shape index: {}]
  %s4 = inlined_call_operand.vmem [shape: f32[2,12,128], index: 4, kind: output, shape index: {}]
  %s5 = sld [smem:[#allocation0]]
  $region47: #{tpu_custom_call.1} parent=0
    _
  %s7 = ssub.s32 1, %s5
  %s8 = scalar_select 0, %s7, %s5
  %s10 = sshll.u32 %s0, 4
  %s11 = int_to_ptr.hbm [resolvable:$true] %s10
  %13 = dma.hbm_to_smem %s11, 16, [#allocation4], [#allocation3]
  %s15 = sshll.u32 %s1, 4
  %s16 = int_to_ptr.hbm [resolvable:$true] %s15
  %18 = dma.hbm_to_smem %s16, 16, [#allocation5], [#allocation3]
  %20 = dma.done [#allocation3], 32
  %21 = sfence
  loop: start=0, step=1, limit=3
  $region2: #{tpu_custom_call.1} parent=0 // loop_pre_header
    _
  $region3: #{tpu_custom_call.1} parent=0 // loop_header
    %s23 = sphi 0, %s27
    %p24 = scmp.ge.s32.totalorder %s23, 3
    %s32 = sphi 0, %s34
    %s35 = sphi 0, %s32
    %s45 = sphi 0, %s35
  $region4: #{tpu_custom_call.1} parent=0 // loop_header_branch
    %26 = sbr.rel (%p24) target = $region8
  $region5: #{tpu_custom_call.1} parent=0 // loop_body
    %s28 = ssub.s32 %s23, 1
    %s29 = sadd.s32 %s23, 1
    %s30 = ssub.s32 %s23, %s29
    %p31 = scmp.eq.s32.totalorder %s30, 0
    %s33 = sadd.s32 %s32, 1
    %s34 = scalar_select %p31, %s32, %s33
    %p36 = pneg %p31
    %p37 = scmp.eq.s32.totalorder %s23, 1
    %p38 = por %p36, %p37
    %p39 = scmp.ne.s32.totalorder %s32, %s35
    %p40 = scmp.eq.s32.totalorder %s23, 0
    %p41 = por %p39, %p40
    %p42 = scmp.ne.s32.totalorder %s32, %s35
    %p43 = scmp.eq.s32.totalorder %s28, 1
    %p44 = por %p42, %p43
    %p46 = scmp.ne.s32.totalorder %s35, %s45
    %p47 = scmp.eq.s32.totalorder %s28, 0
    %p48 = por %p46, %p47
    %p49 = scmp.lt.s32.totalorder %s23, 2
    // Predicated region
    $region9: #{tpu_custom_call.1} parent=5 // pred_check
      %p50 = pneg %p49
    $region10: #{tpu_custom_call.1} parent=5 // pred_check_branch
      %52 = sbr.rel (%p50) target = $region12
    $region11: #{tpu_custom_call.1} parent=5 // pred_region
      %p53 = pneg %p41
      %p54 = pneg %p38
      %p55 = scmp.lt.s32.totalorder %s23, 1
      %s56 = scalar_select %p55, %s23, 1
      %s57 = smul.addr %s56, 2
      %s58 = smul.addr %s57, 8
      %s59 = scalar_lea.vmem %s4, %s58
      %p60 = scmp.lt.s32.totalorder %s23, 1
      %s61 = scalar_select %p60, %s23, 1
      %s62 = smul.addr %s61, 2
      %s63 = smul.addr %s62, 8
      %s64 = scalar_lea.vmem %s4, %s63
      %s65 = sld [smem:[#allocation5 + %s23]]
      %s66 = smul.u32 %s65, 4
      %s67 = scalar_lea.hbm %s3, %s66
      %s68 = scalar_lea.sflag [#allocation2], 8
      // Predicated region
      $region13: #{tpu_custom_call.1} parent=11 // pred_check
        _
      $region14: #{tpu_custom_call.1} parent=11 // pred_check_branch
        %70 = sbr.rel target = $region16
      $region15: #{tpu_custom_call.1} parent=11 // pred_region
        %71 = sst [smem:[#allocation8]] [#allocation7]
        %72 = sst [smem:[#allocation9]] [#allocation6]
      $region16: #{tpu_custom_call.1} parent=11 // pred_fallthru
        _
      %74 = shalt.err (0)
      %s76 = sshll.u32 %s67, 4
      %s77 = int_to_ptr.hbm [resolvable:$true] %s76
      %s78 = sshll.u32 %s64, 4
      %s79 = int_to_ptr.vmem [resolvable:$true] %s78
      %81 = dma.hbm_to_vmem [thread:$0]  %s77, 64, %s79, %s68
      loop: start=0, step=1, limit=8
      $region17: #{tpu_custom_call.1} parent=11 // loop_pre_header
        _
      $region18: #{tpu_custom_call.1} parent=11 // loop_header
        %s83 = sphi 0, %s87
        %p84 = scmp.ge.s32.totalorder %s83, 8
      $region19: #{tpu_custom_call.1} parent=11 // loop_header_branch
        %86 = sbr.rel (%p84) target = $region23
      $region20: #{tpu_custom_call.1} parent=11 // loop_body
        %s88 = smul.u32 %s23, 8
        %s89 = sadd.s32 %s88, %s83
        %s90 = sld [smem:[#allocation4 + %s89]]
        %s91 = sadd.s32 %s83, 4
        %s92 = scalar_lea.hbm %s2, %s90
        %s93 = scalar_lea.vmem %s64, %s91
        %s94 = scalar_lea.sflag [#allocation2], %s83
        // Predicated region
        $region24: #{tpu_custom_call.1} parent=20 // pred_check
          _
        $region25: #{tpu_custom_call.1} parent=20 // pred_check_branch
          %96 = sbr.rel target = $region27
        $region26: #{tpu_custom_call.1} parent=20 // pred_region
          %97 = sst [smem:[#allocation8]] [#allocation11]
          %98 = sst [smem:[#allocation9]] [#allocation10]
        $region27: #{tpu_custom_call.1} parent=20 // pred_fallthru
          _
        %100 = shalt.err (0)
        %s102 = sshll.u32 %s92, 4
        %s103 = int_to_ptr.hbm [resolvable:$true] %s102
        %s104 = sshll.u32 %s93, 4
        %s105 = int_to_ptr.vmem [resolvable:$true] %s104
        %107 = dma.hbm_to_vmem [thread:$0]  %s103, 16, %s105, %s94
      $region21: #{tpu_custom_call.1} parent=11 // loop_footer
        %s87 = sadd.s32 1, %s83
      $region22: #{tpu_custom_call.1} parent=11 // loop_footer_branch
        %82 = sbr.rel target = $region18
      $region23: #{tpu_custom_call.1} parent=11 // loop_exit
        _
      loop: start=0, step=1, limit=8
      $region28: #{tpu_custom_call.1} parent=11 // loop_pre_header
        _
      $region29: #{tpu_custom_call.1} parent=11 // loop_header
        %s109 = sphi 0, %s113
        %p110 = scmp.ge.s32.totalorder %s109, 8
      $region30: #{tpu_custom_call.1} parent=11 // loop_header_branch
        %112 = sbr.rel (%p110) target = $region34
      $region31: #{tpu_custom_call.1} parent=11 // loop_body
        %s114 = smul.u32 %s23, 8
        %s115 = sadd.s32 %s114, %s109
        %s116 = sld [smem:[#allocation4 + %s115]]
        %s117 = scalar_lea.sflag [#allocation2], %s109
        %s118 = smul.u32 1, 1
        %s119 = sshll.u32 %s118, 4
        %120 = dma.done %s117, %s119
      $region32: #{tpu_custom_call.1} parent=11 // loop_footer
        %s113 = sadd.s32 1, %s109
      $region33: #{tpu_custom_call.1} parent=11 // loop_footer_branch
        %108 = sbr.rel target = $region29
      $region34: #{tpu_custom_call.1} parent=11 // loop_exit
        _
      %s121 = smul.u32 4, 1
      %s122 = sshll.u32 %s121, 4
      %123 = dma.done %s68, %s122
      %p124 = scmp.lt.s32.totalorder %s23, 1
      %s125 = scalar_select %p124, %s23, 1
      %s126 = smul.addr %s125, 2
      %s127 = smul.addr %s126, 8
      %s128 = scalar_lea.vmem %s4, %s127
      // Predicated region
      $region35: #{tpu_custom_call.1} parent=11 // pred_check
        %p129 = pneg %p38
      $region36: #{tpu_custom_call.1} parent=11 // pred_check_branch
        %131 = sbr.rel (%p129) target = $region38
      $region37: #{tpu_custom_call.1} parent=11 // pred_region
        _
      $region38: #{tpu_custom_call.1} parent=11 // pred_fallthru
        _
    $region12: #{tpu_custom_call.1} parent=5 // pred_fallthru
      _
    %p132 = scmp.le.s32.totalorder 1, %s23
    // Predicated region
    $region39: #{tpu_custom_call.1} parent=5 // pred_check
      %p133 = pneg %p132
    $region40: #{tpu_custom_call.1} parent=5 // pred_check_branch
      %135 = sbr.rel (%p133) target = $region42
    $region41: #{tpu_custom_call.1} parent=5 // pred_region
      %s136 = ssub.s32 %s23, 1
      // Predicated region
      $region43: #{tpu_custom_call.1} parent=41 // pred_check
        %p137 = pneg %p44
      $region44: #{tpu_custom_call.1} parent=41 // pred_check_branch
        %139 = sbr.rel (%p137) target = $region46
      $region45: #{tpu_custom_call.1} parent=41 // pred_region
        %p140 = scmp.lt.s32.totalorder %s28, 1
        %s141 = scalar_select %p140, %s28, 1
        %s142 = smul.addr %s141, 2
        %s143 = smul.addr %s142, 8
        %s144 = scalar_lea.vmem %s4, %s143
      $region46: #{tpu_custom_call.1} parent=41 // pred_fallthru
        _
    $region42: #{tpu_custom_call.1} parent=5 // pred_fallthru
      _
  $region6: #{tpu_custom_call.1} parent=0 // loop_footer
    %s27 = sadd.s32 1, %s23
  $region7: #{tpu_custom_call.1} parent=0 // loop_footer_branch
    %22 = sbr.rel target = $region3
  $region8: #{tpu_custom_call.1} parent=0 // loop_exit
    _
  %145 = vsyncmov [#allocation2]
  %s146 = vpop.sfrf %145
  %p147 = scmp.eq.s32.totalorder %s146, 0
  %p148 = pneg %p147
  %150 = shalt.err (%p148)
  %s151 = scalar_lea.sflag [#allocation2], 1
  %152 = vsyncmov %s151
  %s153 = vpop.sfrf %152
  %p154 = scmp.eq.s32.totalorder %s153, 0
  %p155 = pneg %p154
  %157 = shalt.err (%p155)
  %s158 = scalar_lea.sflag [#allocation2], 2
  %159 = vsyncmov %s158
  %s160 = vpop.sfrf %159
  %p161 = scmp.eq.s32.totalorder %s160, 0
  %p162 = pneg %p161
  %164 = shalt.err (%p162)
  %s165 = scalar_lea.sflag [#allocation2], 3
  %166 = vsyncmov %s165
  %s167 = vpop.sfrf %166
  %p168 = scmp.eq.s32.totalorder %s167, 0
  %p169 = pneg %p168
  %171 = shalt.err (%p169)
  %s172 = scalar_lea.sflag [#allocation2], 4
  %173 = vsyncmov %s172
  %s174 = vpop.sfrf %173
  %p175 = scmp.eq.s32.totalorder %s174, 0
  %p176 = pneg %p175
  %178 = shalt.err (%p176)
  %s179 = scalar_lea.sflag [#allocation2], 5
  %180 = vsyncmov %s179
  %s181 = vpop.sfrf %180
  %p182 = scmp.eq.s32.totalorder %s181, 0
  %p183 = pneg %p182
  %185 = shalt.err (%p183)
  %s186 = scalar_lea.sflag [#allocation2], 6
  %187 = vsyncmov %s186
  %s188 = vpop.sfrf %187
  %p189 = scmp.eq.s32.totalorder %s188, 0
  %p190 = pneg %p189
  %192 = shalt.err (%p190)
  %s193 = scalar_lea.sflag [#allocation2], 7
  %194 = vsyncmov %s193
  %s195 = vpop.sfrf %194
  %p196 = scmp.eq.s32.totalorder %s195, 0
  %p197 = pneg %p196
  %199 = shalt.err (%p197)
  %s200 = scalar_lea.sflag [#allocation2], 8
  %201 = vsyncmov %s200
  %s202 = vpop.sfrf %201
  %p203 = scmp.eq.s32.totalorder %s202, 0
  %p204 = pneg %p203
  %206 = shalt.err (%p204)

</llo_original>
